<compile_context>
chip_gen: v7x
topology: tpu7x:2x2x1
jax: 0.10.0
libtpu: 0.0.40
codegen_flags: <defaults>
</compile_context>

<pallas_src>
import jax
import jax.numpy as jnp
from jax.experimental import pallas as pl
from jax.experimental.pallas import tpu as pltpu


def _fma_kernel(params_ref, x_ref, o_ref):
    # params tile is (tile_r, 2): column 0 = foo, column 1 = bar.
    p = params_ref[...]
    foo = p[:, 0:1]  # (tile_r, 1) -> broadcast across lanes on the VPU
    bar = p[:, 1:2]
    o_ref[...] = foo * x_ref[...] + bar


def _largest_divisor_multiple(dim: int, unit: int, cap: int) -> int:
    """Largest t <= cap with t % unit == 0 and dim % t == 0; falls back to the
    full extent `dim` (a full-extent block is always a legal block shape)."""
    if dim % unit != 0:
        return dim
    best = unit
    t = unit
    limit = min(dim, cap)
    while t <= limit:
        if dim % t == 0:
            best = t
        t += unit
    return best


def module_without_slots_forward(foo, bar, x):
    """JAX/Pallas equivalent of ModuleWithoutSlots(foo, bar)(x) for NCHW x with
    per-channel (C,1,1) foo/bar parameters."""
    N, C, H, W = x.shape
    rows = N * C          # per-(batch, channel) rows
    cols = H * W          # spatial elements per row (lane-dense axis)
    itemsize = jnp.dtype(x.dtype).itemsize

    # Lane-dense 2-D view of x; elementwise semantics are layout agnostic.
    x2 = x.reshape(rows, cols)

    # Tiny (rows, 2) per-row parameter slab (N*C*2 elements total) -- NOT
    # broadcast to x's full shape, so the kernel streams only x in and y out.
    foo_r = jnp.broadcast_to(jnp.reshape(foo, (1, C)), (N, C)).reshape(rows)
    bar_r = jnp.broadcast_to(jnp.reshape(bar, (1, C)), (N, C)).reshape(rows)
    params = jnp.stack([foo_r, bar_r], axis=-1).astype(x.dtype)  # (rows, 2)

    # --- Tile selection ---------------------------------------------------
    # ~2 MiB per stream per buffer; double-buffered x + y ~= 8 MiB VMEM, safe
    # on every generation while large enough to hit the HBM roofline.
    target_bytes = 2 * 1024 * 1024
    tile_r = _largest_divisor_multiple(rows, 8, 512)
    cap_c = max(128, (target_bytes // (tile_r * itemsize)) // 128 * 128)
    tile_c = _largest_divisor_multiple(cols, 128, cap_c)

    grid = (rows // tile_r, cols // tile_c)

    x_spec = pl.BlockSpec((tile_r, tile_c), lambda i, j: (i, j))
    p_spec = pl.BlockSpec((tile_r, 2), lambda i, j: (i, 0))

    out2 = pl.pallas_call(
        _fma_kernel,
        out_shape=jax.ShapeDtypeStruct((rows, cols), x.dtype),
        grid_spec=pltpu.PrefetchScalarGridSpec(
            num_scalar_prefetch=0,
            grid=grid,
            in_specs=[p_spec, x_spec],
            out_specs=x_spec,
        ),
        compiler_params=pltpu.CompilerParams(
            dimension_semantics=("parallel", "parallel"),
            vmem_limit_bytes=32 * 1024 * 1024,
        ),
    )(params, x2)

    return out2.reshape(x.shape)


if __name__ == "__main__":
    key = jax.random.PRNGKey(0)
    kx, kf, kb = jax.random.split(key, 3)

    # NCHW input, small shapes.
    N, C, H, W = 2, 4, 16, 16
    x = jax.random.normal(kx, (N, C, H, W), dtype=jnp.float32)

    # Per-channel parameters, shapes broadcast against NCHW exactly as torch.
    foo = jax.random.normal(kf, (C, 1, 1), dtype=jnp.float32)
    bar = jax.random.normal(kb, (C, 1, 1), dtype=jnp.float32)

    y = module_without_slots_forward(foo, bar, x)
    y = jax.block_until_ready(y)

    # Reference check against plain JAX (same semantics as torch broadcasting).
    y_ref = foo * x + bar
    assert y.shape == x.shape and y.dtype == x.dtype
    assert jnp.allclose(y, y_ref, atol=1e-6, rtol=1e-6)

    print("KERNEL_OK")
</pallas_src>

<mosaic_0001>
module attributes {stable_mosaic.version = 11 : i64} {
  func.func @_fma_kernel(%arg0: i32, %arg1: i32, %arg2: memref<8x2xf32, #tpu.memory_space<vmem>>, %arg3: memref<8x256xf32, #tpu.memory_space<vmem>>, %arg4: memref<8x256xf32, #tpu.memory_space<vmem>>) attributes {dimension_semantics = [#tpu.dimension_semantics<parallel>, #tpu.dimension_semantics<parallel>], iteration_bounds = array<i64: 1, 1>, scalar_prefetch = 0 : i64, scratch_operands = 0 : i64, tpu.core_type = #tpu.core_type<tc>, window_params = [{transform_indices = @transform_0, window_bounds = array<i64: 8, 2>}, {transform_indices = @transform_1, window_bounds = array<i64: 8, 256>}, {transform_indices = @transform_2, window_bounds = array<i64: 8, 256>}]} {
    %c0 = arith.constant 0 : index
    %c0_0 = arith.constant 0 : index
    %0 = vector.load %arg2[%c0, %c0_0] : memref<8x2xf32, #tpu.memory_space<vmem>>, vector<8x2xf32>
    %1 = vector.extract_strided_slice %0 {offsets = [0, 0], sizes = [8, 1], strides = [1, 1]} : vector<8x2xf32> to vector<8x1xf32>
    %2 = vector.extract_strided_slice %0 {offsets = [0, 1], sizes = [8, 1], strides = [1, 1]} : vector<8x2xf32> to vector<8x1xf32>
    %c0_1 = arith.constant 0 : index
    %c0_2 = arith.constant 0 : index
    %3 = vector.load %arg3[%c0_1, %c0_2] : memref<8x256xf32, #tpu.memory_space<vmem>>, vector<8x256xf32>
    %4 = vector.broadcast %1 : vector<8x1xf32> to vector<8x256xf32>
    %5 = arith.mulf %4, %3 : vector<8x256xf32>
    %6 = vector.broadcast %2 : vector<8x1xf32> to vector<8x256xf32>
    %7 = arith.addf %5, %6 : vector<8x256xf32>
    %c0_3 = arith.constant 0 : index
    %c0_4 = arith.constant 0 : index
    %8 = vector.load %arg4[%c0_3, %c0_4] : memref<8x256xf32, #tpu.memory_space<vmem>>, vector<8x256xf32>
    tpu.vector_store %arg4[%c0_3, %c0_4], %7 {strides = array<i32>} : memref<8x256xf32, #tpu.memory_space<vmem>>, vector<8x256xf32>,
    return
  }
  func.func @transform_0(%arg0: i32, %arg1: i32) -> (i32, i32) {
    %c0_i32 = arith.constant 0 : i32
    %c0_i32_0 = arith.constant 0 : i32
    return %arg0, %c0_i32 : i32, i32
  }
  func.func @transform_1(%arg0: i32, %arg1: i32) -> (i32, i32) {
    %c0_i32 = arith.constant 0 : i32
    return %arg0, %arg1 : i32, i32
  }
  func.func @transform_2(%arg0: i32, %arg1: i32) -> (i32, i32) {
    %c0_i32 = arith.constant 0 : i32
    return %arg0, %arg1 : i32, i32
  }
}

</mosaic_0001>

<llo_original>
// kernel: tpu_custom_call.1
$region0: #{tpu_custom_call.1}
  #allocation0 [shape = 'u32[]', space=smem, size = 0x4, offset = 0x4, fixed_abs, tag = 'smem constant byte address 0x4 - core index']
  #allocation1 [shape = 'u32[144,128]{1,0:T(1,128)}', space=vmem, size = 0x12000, scoped, tag = 'internal scratch']
  %s0 = inlined_call_operand.vmem [shape: f32[8,2], index: 0, kind: input, shape index: {}]
  %s1 = inlined_call_operand.hbm [shape: f32[8,256], index: 1, kind: input, shape index: {}]
  %s2 = inlined_call_operand.hbm [shape: f32[8,256], index: 2, kind: output, shape index: {}]
  %s3 = sld [smem:[#allocation0]]
  $region22: #{tpu_custom_call.1} parent=0
    _
  %s5 = ssub.s32 1, %s3
  %s6 = scalar_select 0, %s5, %s3
  $region1: #{tpu_custom_call.1} parent=0
    #allocation2 [shape = 'u8[8192]{0}', space=vmem, size = 0x2000, scoped, tag = 'input window, operand 1, single buffered']
    #allocation3 [shape = 's32[1]{0}', space=sflag, size = 0x4, scoped, tag = 'scoped memory for tpu_custom_call.1']
    #allocation4 [shape = 's32[1]{0}', space=sflag, size = 0x4, scoped, tag = 'scoped memory for tpu_custom_call.1']
    #allocation5 [shape = 'u8[8192]{0}', space=vmem, size = 0x2000, scoped, tag = 'output window, operand 0, single buffered']
    %7 = vsyncpa [#allocation3], 0
    %8 = vsyncpa [#allocation4], 0
    // Predicated region
    $region2: #{tpu_custom_call.1} parent=1 // pred_check
      _
    $region3: #{tpu_custom_call.1} parent=1 // pred_check_branch
      %10 = sbr.rel (0) target = $region5
    $region4: #{tpu_custom_call.1} parent=1 // pred_region
      _
    $region5: #{tpu_custom_call.1} parent=1 // pred_fallthru
      _
    // Predicated region
    $region6: #{tpu_custom_call.1} parent=1 // pred_check
      _
    $region7: #{tpu_custom_call.1} parent=1 // pred_check_branch
      %12 = sbr.rel (0) target = $region9
    $region8: #{tpu_custom_call.1} parent=1 // pred_region
      %s14 = ssub.s32 256, 256
      %15 = vsyncadd [#allocation3], %s14
      %s17 = sshll.u32 [#allocation2], 4
      %s18 = int_to_ptr.vmem [resolvable:$true] %s17
      %20 = dma.hbm_to_vmem [thread:$0]  %s1, 256, %s18, [#allocation3]
    $region9: #{tpu_custom_call.1} parent=1 // pred_fallthru
      _
    // Predicated region
    $region10: #{tpu_custom_call.1} parent=1 // pred_check
      _
    $region11: #{tpu_custom_call.1} parent=1 // pred_check_branch
      %22 = sbr.rel (0) target = $region13
    $region12: #{tpu_custom_call.1} parent=1 // pred_region
      %23 = dma.done [#allocation3], 256
    $region13: #{tpu_custom_call.1} parent=1 // pred_fallthru
      _
    %v24 = vld [vmem:[%s0] sm:$0xff]
    %v25 = vld [vmem:[#allocation2] sm:$0xff]
    %v26 = vld [vmem:[#allocation2 + $0x8] sm:$0xff]
    %28 = vset.pattern.permute.xlu0 0
    %29 = vperm.xlu0 %28, %v24
    %v30 = vpop.permute.xlu0 %29
    %v32 = vmul.f32 %v30, %v25
    %v33 = vmul.f32 %v30, %v26
    %34 = vset.pattern.permute.xlu0 1
    %35 = vperm.xlu0 %34, %v24
    %v36 = vpop.permute.xlu0 %35
    %v38 = vadd.f32 %v32, %v36
    %v39 = vadd.f32 %v33, %v36
    %40 = vst [vmem:[#allocation5] sm:$0xff] %v38
    %41 = vst [vmem:[#allocation5 + $0x8] sm:$0xff] %v39
    // Predicated region
    $region14: #{tpu_custom_call.1} parent=1 // pred_check
      _
    $region15: #{tpu_custom_call.1} parent=1 // pred_check_branch
      %43 = sbr.rel (0) target = $region17
    $region16: #{tpu_custom_call.1} parent=1 // pred_region
      %s45 = ssub.s32 256, 256
      %46 = vsyncadd [#allocation4], %s45
      %s48 = sshll.u32 [#allocation5], 4
      %s49 = int_to_ptr.vmem [resolvable:$true] %s48
      %51 = dma.vmem_to_hbm [thread:$0]  %s49, 256, %s2, [#allocation4]
    $region17: #{tpu_custom_call.1} parent=1 // pred_fallthru
      _
    // Predicated region
    $region18: #{tpu_custom_call.1} parent=1 // pred_check
      _
    $region19: #{tpu_custom_call.1} parent=1 // pred_check_branch
      %53 = sbr.rel (0) target = $region21
    $region20: #{tpu_custom_call.1} parent=1 // pred_region
      %54 = dma.done [#allocation4], 256
    $region21: #{tpu_custom_call.1} parent=1 // pred_fallthru
      _
    %55 = vsyncpa [#allocation3], 1
    %56 = vsyncpa [#allocation4], 1

</llo_original>
